<compile_context>
chip_gen: v7x
topology: tpu7x:2x2x1
jax: 0.10.0
libtpu: 0.0.40
codegen_flags: <defaults>
</compile_context>

<pallas_src>
import functools

import jax
import jax.numpy as jnp
from jax.experimental import pallas as pl
from jax.experimental.pallas import tpu as pltpu

LANE = 128      # vreg lane width
SUBLANE = 8     # f32 sublane count


def _round_up(x, m):
    return (x + m - 1) // m * m


def _cdiv(a, b):
    return -(-a // b)


# ----------------------------------------------------------------------------
# Pallas kernel: fused MLP head, invoked once per batch tile.
#   h = relu(x @ W1 + b1)
#   h = relu(h @ W2 + b2)
#   h = dropout(h)          # p=0.1 -> identity in eval/inference mode
#   y = h @ W3 + b3
# All operands are f32; accumulation is f32 (preferred_element_type).
# b_ref rows 0/1/2 hold b1/b2/b3, zero-padded to the widest lane-padded dim.
# ----------------------------------------------------------------------------
def mlp_head_kernel(x_ref, w1_ref, w2_ref, w3_ref, b_ref, o_ref, *,
                    h1p, h2p, op):
    h = jnp.dot(x_ref[...], w1_ref[...], preferred_element_type=jnp.float32)
    h = jnp.maximum(h + b_ref[0:1, 0:h1p], 0.0)

    h = jnp.dot(h, w2_ref[...], preferred_element_type=jnp.float32)
    h = jnp.maximum(h + b_ref[1:2, 0:h2p], 0.0)

    # nn.Dropout(p=0.1): identity in eval/inference mode (no mask, no scale).
    # TODO(synk): training-mode dropout would use pltpu.prng_seed +
    # pltpu.prng_random_bits masking with 1/(1-p) scaling; not part of the
    # eval forward pass.

    y = jnp.dot(h, w3_ref[...], preferred_element_type=jnp.float32)
    o_ref[...] = (y + b_ref[2:3, 0:op]).astype(o_ref.dtype)


def _choose_batch_tile(batch):
    """Pick (batch_tile, padded_batch).

    Goals: tiles as large as possible (<= 1024 rows) to amortize per-grid-step
    overhead; >= 2 grid steps whenever batch >= 16 so both v7x TensorCores
    participate; near-zero padding (even split, rounded to 8 sublanes).
    """
    b8 = _round_up(batch, SUBLANE)
    if b8 < 2 * SUBLANE:                 # too small to split
        return b8, b8
    n_tiles = max(2, _cdiv(b8, 1024))    # fewest <=1024-row tiles, min 2
    bt = _round_up(_cdiv(batch, n_tiles), SUBLANE)
    return bt, _round_up(batch, bt)


def mlp_head(x, w1p, w2p, w3p, biasp, *, out_size):
    """x: [B, input_size] f32 CLS hidden states -> [B, out_size] f32.

    Call this under an outer jit (see transformer_mlp_forward) so the pad of
    x fuses into its producer instead of an extra HBM pass.
    """
    B, in_features = x.shape
    in_p, h1p = w1p.shape
    h2p = w2p.shape[1]
    op = w3p.shape[1]

    bt, b_pad = _choose_batch_tile(B)

    # Zero-pad batch to the tile grid and features to the lane-padded width.
    xp = jnp.pad(x, ((0, b_pad - B), (0, in_p - in_features)))

    # Structural VMEM budget check: resident weights + fused bias tile +
    # double-buffered x/out tiles must fit comfortably under the default
    # scoped VMEM limit (16 MiB on v5e; v7x has only 64 MiB physical per TC).
    # Fail loudly here if hidden sizes grow toward real transformer widths —
    # at that point add a K/N grid axis with an f32 accumulator instead.
    f32b = 4
    resident = (w1p.size + w2p.size + w3p.size + biasp.size) * f32b
    streamed = 2 * bt * (in_p + op) * f32b       # double-buffered in/out tiles
    assert resident + streamed < 12 * 1024 * 1024, (
        "MLP head no longer fits the resident-weight design "
        f"({resident + streamed} bytes); add a reduction grid axis.")

    kernel = functools.partial(mlp_head_kernel, h1p=h1p, h2p=h2p, op=op)

    y = pl.pallas_call(
        kernel,
        out_shape=jax.ShapeDtypeStruct((b_pad, op), jnp.float32),
        grid=(b_pad // bt,),
        in_specs=[
            pl.BlockSpec((bt, in_p), lambda i: (i, 0)),    # streamed batch tile
            pl.BlockSpec(w1p.shape, lambda i: (0, 0)),     # weights stay resident
            pl.BlockSpec(w2p.shape, lambda i: (0, 0)),
            pl.BlockSpec(w3p.shape, lambda i: (0, 0)),
            pl.BlockSpec(biasp.shape, lambda i: (0, 0)),   # fused bias tile
        ],
        out_specs=pl.BlockSpec((bt, op), lambda i: (i, 0)),
        compiler_params=pltpu.CompilerParams(
            dimension_semantics=("parallel",),             # 2 TCs on v7x
        ),
    )(xp, w1p, w2p, w3p, biasp)

    return y[:B, :out_size]


# ----------------------------------------------------------------------------
# Deterministic parameter init (synthetic, no checkpoint load)
# ----------------------------------------------------------------------------
def init_params(key, input_size, hidden_sizes, output_size, vocab_size):
    keys = jax.random.split(key, 7)
    scale = 0.05
    return {
        # surrogate "transformer" embedding table
        "emb": scale * jax.random.normal(keys[0], (vocab_size, input_size), jnp.float32),
        # fc_layers[0]: input_size -> hidden_sizes[0]   (stored [in, out])
        "w1": scale * jax.random.normal(keys[1], (input_size, hidden_sizes[0]), jnp.float32),
        "b1": scale * jax.random.normal(keys[2], (hidden_sizes[0],), jnp.float32),
        # fc_layers[1]: hidden_sizes[0] -> hidden_sizes[1]
        "w2": scale * jax.random.normal(keys[3], (hidden_sizes[0], hidden_sizes[1]), jnp.float32),
        "b2": scale * jax.random.normal(keys[4], (hidden_sizes[1],), jnp.float32),
        # output_layer: hidden_sizes[-1] -> output_size
        "w3": scale * jax.random.normal(keys[5], (hidden_sizes[1], output_size), jnp.float32),
        "b3": scale * jax.random.normal(keys[6], (output_size,), jnp.float32),
    }


def prepare_head_params(params):
    """Zero-pad weights to 128-lane multiples (f32, exact parity) and fuse the
    three biases into a single (8, lane-padded) f32 tile (rows 0/1/2)."""
    w1, w2, w3 = params["w1"], params["w2"], params["w3"]
    in_p = _round_up(w1.shape[0], LANE)
    h1p = _round_up(w1.shape[1], LANE)
    h2p = _round_up(w2.shape[1], LANE)
    op = _round_up(w3.shape[1], LANE)
    bias_w = max(h1p, h2p, op)

    def pad2(a, rows, cols):
        return jnp.pad(a, ((0, rows - a.shape[0]), (0, cols - a.shape[1])))

    w1p = pad2(w1, in_p, h1p).astype(jnp.float32)
    w2p = pad2(w2, h1p, h2p).astype(jnp.float32)
    w3p = pad2(w3, h2p, op).astype(jnp.float32)

    biasp = jnp.zeros((SUBLANE, bias_w), jnp.float32)
    biasp = biasp.at[0, :params["b1"].shape[0]].set(params["b1"])
    biasp = biasp.at[1, :params["b2"].shape[0]].set(params["b2"])
    biasp = biasp.at[2, :params["b3"].shape[0]].set(params["b3"])
    return w1p, w2p, w3p, biasp


def transformer_surrogate(params, input_ids, attention_mask):
    """Deterministic stand-in for AutoModel(...)[0][:, 0, :].

    # TODO(synk): pretrained HF AutoModel backbone has no Pallas equivalent
    # without its checkpoint; replaced by a deterministic embedding lookup +
    # masked mean-pool mixed into the CLS-position embedding (plain JAX glue).
    """
    emb = params["emb"][input_ids]                         # [B, S, H]
    mask = attention_mask.astype(jnp.float32)[..., None]   # [B, S, 1]
    pooled = (emb * mask).sum(axis=1) / jnp.maximum(mask.sum(axis=1), 1.0)
    return jnp.tanh(emb[:, 0, :] + pooled)                 # [B, H]


@functools.partial(jax.jit, static_argnames=("output_size",))
def transformer_mlp_forward(params, head_params, input_ids, attention_mask,
                            output_size):
    # Single end-to-end jit: the surrogate output, its pad to lane width and
    # the Pallas head all live in one XLA program (no wrapper-side HBM pass).
    x = transformer_surrogate(params, input_ids, attention_mask)    # plain JAX
    w1p, w2p, w3p, biasp = head_params
    return mlp_head(x, w1p, w2p, w3p, biasp, out_size=output_size)  # Pallas


# ----------------------------------------------------------------------------
# Reference (plain JAX, full f32) for a sanity check
# ----------------------------------------------------------------------------
def reference_forward(params, input_ids, attention_mask):
    x = transformer_surrogate(params, input_ids, attention_mask)
    h = jnp.maximum(x @ params["w1"] + params["b1"], 0.0)
    h = jnp.maximum(h @ params["w2"] + params["b2"], 0.0)
    return h @ params["w3"] + params["b3"]


if __name__ == "__main__":
    # Small shapes implied by the forward pass.
    batch, seq = 4, 8
    vocab_size = 100
    input_size = 32            # transformer hidden size
    hidden_sizes = [64, 32]
    output_size = 8

    key = jax.random.PRNGKey(0)
    k_params, k_ids = jax.random.split(key)

    params = init_params(k_params, input_size, hidden_sizes, output_size,
                         vocab_size)
    head_params = prepare_head_params(params)

    input_ids = jax.random.randint(k_ids, (batch, seq), 0, vocab_size,
                                   dtype=jnp.int32)
    attention_mask = jnp.ones((batch, seq), dtype=jnp.int32)

    out = transformer_mlp_forward(params, head_params, input_ids,
                                  attention_mask, output_size)
    out = jax.block_until_ready(out)

    ref = reference_forward(params, input_ids, attention_mask)
    assert out.shape == (batch, output_size)
    # Same f32 data, but MXU vs XLA matmul accumulation order can differ.
    assert jnp.allclose(out, ref, atol=1e-2, rtol=1e-2), (
        f"max abs err {jnp.max(jnp.abs(out - ref))}")

    print("KERNEL_OK")
</pallas_src>

<mosaic_0001>
module attributes {stable_mosaic.version = 11 : i64} {
  func.func @mlp_head_kernel(%arg0: i32, %arg1: memref<8x128xf32, #tpu.memory_space<vmem>>, %arg2: memref<128x128xf32, #tpu.memory_space<vmem>>, %arg3: memref<128x128xf32, #tpu.memory_space<vmem>>, %arg4: memref<128x128xf32, #tpu.memory_space<vmem>>, %arg5: memref<8x128xf32, #tpu.memory_space<vmem>>, %arg6: memref<8x128xf32, #tpu.memory_space<vmem>>) attributes {dimension_semantics = [#tpu.dimension_semantics<parallel>], iteration_bounds = array<i64: 1>, scalar_prefetch = 0 : i64, scratch_operands = 0 : i64, tpu.core_type = #tpu.core_type<tc>, window_params = [{transform_indices = @transform_0, window_bounds = array<i64: 8, 128>}, {pipeline_mode = #tpu.pipeline_mode<synchronous>, transform_indices = @transform_1, window_bounds = array<i64: 128, 128>}, {pipeline_mode = #tpu.pipeline_mode<synchronous>, transform_indices = @transform_2, window_bounds = array<i64: 128, 128>}, {pipeline_mode = #tpu.pipeline_mode<synchronous>, transform_indices = @transform_3, window_bounds = array<i64: 128, 128>}, {pipeline_mode = #tpu.pipeline_mode<synchronous>, transform_indices = @transform_4, window_bounds = array<i64: 8, 128>}, {transform_indices = @transform_5, window_bounds = array<i64: 8, 128>}]} {
    %c0 = arith.constant 0 : index
    %c0_0 = arith.constant 0 : index
    %0 = vector.load %arg1[%c0, %c0_0] : memref<8x128xf32, #tpu.memory_space<vmem>>, vector<8x128xf32>
    %c0_1 = arith.constant 0 : index
    %c0_2 = arith.constant 0 : index
    %1 = vector.load %arg2[%c0_1, %c0_2] : memref<128x128xf32, #tpu.memory_space<vmem>>, vector<128x128xf32>
    %cst = arith.constant dense<0.000000e+00> : vector<8x128xf32>
    %2 = tpu.matmul %0, %1, %cst {dimension_numbers = #tpu.dot_dimension_numbers<[1], [0], [0], [1], [0, 0, 1, 1], [], []>} : vector<8x128xf32>, vector<128x128xf32>, vector<8x128xf32> -> vector<8x128xf32>
    %c0_3 = arith.constant 0 : index
    %c0_4 = arith.constant 0 : index
    %3 = vector.load %arg5[%c0_3, %c0_4] : memref<8x128xf32, #tpu.memory_space<vmem>>, vector<1x128xf32>
    %4 = vector.broadcast %3 : vector<1x128xf32> to vector<8x128xf32>
    %5 = arith.addf %2, %4 : vector<8x128xf32>
    %cst_5 = arith.constant 0.000000e+00 : f32
    %6 = vector.broadcast %cst_5 : f32 to vector<8x128xf32>
    %7 = arith.maximumf %5, %6 : vector<8x128xf32>
    %c0_6 = arith.constant 0 : index
    %c0_7 = arith.constant 0 : index
    %8 = vector.load %arg3[%c0_6, %c0_7] : memref<128x128xf32, #tpu.memory_space<vmem>>, vector<128x128xf32>
    %cst_8 = arith.constant dense<0.000000e+00> : vector<8x128xf32>
    %9 = tpu.matmul %7, %8, %cst_8 {dimension_numbers = #tpu.dot_dimension_numbers<[1], [0], [0], [1], [0, 0, 1, 1], [], []>} : vector<8x128xf32>, vector<128x128xf32>, vector<8x128xf32> -> vector<8x128xf32>
    %c1 = arith.constant 1 : index
    %c0_9 = arith.constant 0 : index
    %10 = vector.load %arg5[%c1, %c0_9] : memref<8x128xf32, #tpu.memory_space<vmem>>, vector<1x128xf32>
    %11 = vector.broadcast %10 : vector<1x128xf32> to vector<8x128xf32>
    %12 = arith.addf %9, %11 : vector<8x128xf32>
    %cst_10 = arith.constant 0.000000e+00 : f32
    %13 = vector.broadcast %cst_10 : f32 to vector<8x128xf32>
    %14 = arith.maximumf %12, %13 : vector<8x128xf32>
    %c0_11 = arith.constant 0 : index
    %c0_12 = arith.constant 0 : index
    %15 = vector.load %arg4[%c0_11, %c0_12] : memref<128x128xf32, #tpu.memory_space<vmem>>, vector<128x128xf32>
    %cst_13 = arith.constant dense<0.000000e+00> : vector<8x128xf32>
    %16 = tpu.matmul %14, %15, %cst_13 {dimension_numbers = #tpu.dot_dimension_numbers<[1], [0], [0], [1], [0, 0, 1, 1], [], []>} : vector<8x128xf32>, vector<128x128xf32>, vector<8x128xf32> -> vector<8x128xf32>
    %c2 = arith.constant 2 : index
    %c0_14 = arith.constant 0 : index
    %17 = vector.load %arg5[%c2, %c0_14] : memref<8x128xf32, #tpu.memory_space<vmem>>, vector<1x128xf32>
    %18 = vector.broadcast %17 : vector<1x128xf32> to vector<8x128xf32>
    %19 = arith.addf %16, %18 : vector<8x128xf32>
    %c0_15 = arith.constant 0 : index
    %c0_16 = arith.constant 0 : index
    %20 = vector.load %arg6[%c0_15, %c0_16] : memref<8x128xf32, #tpu.memory_space<vmem>>, vector<8x128xf32>
    tpu.vector_store %arg6[%c0_15, %c0_16], %19 {strides = array<i32>} : memref<8x128xf32, #tpu.memory_space<vmem>>, vector<8x128xf32>,
    return
  }
  func.func @transform_0(%arg0: i32) -> (i32, i32) {
    %c0_i32 = arith.constant 0 : i32
    %c0_i32_0 = arith.constant 0 : i32
    return %arg0, %c0_i32 : i32, i32
  }
  func.func @transform_1(%arg0: i32) -> (i32, i32) {
    %c0_i32 = arith.constant 0 : i32
    %c0_i32_0 = arith.constant 0 : i32
    %c0_i32_1 = arith.constant 0 : i32
    return %c0_i32, %c0_i32_0 : i32, i32
  }
  func.func @transform_2(%arg0: i32) -> (i32, i32) {
    %c0_i32 = arith.constant 0 : i32
    %c0_i32_0 = arith.constant 0 : i32
    %c0_i32_1 = arith.constant 0 : i32
    return %c0_i32, %c0_i32_0 : i32, i32
  }
  func.func @transform_3(%arg0: i32) -> (i32, i32) {
    %c0_i32 = arith.constant 0 : i32
    %c0_i32_0 = arith.constant 0 : i32
    %c0_i32_1 = arith.constant 0 : i32
    return %c0_i32, %c0_i32_0 : i32, i32
  }
  func.func @transform_4(%arg0: i32) -> (i32, i32) {
    %c0_i32 = arith.constant 0 : i32
    %c0_i32_0 = arith.constant 0 : i32
    %c0_i32_1 = arith.constant 0 : i32
    return %c0_i32, %c0_i32_0 : i32, i32
  }
  func.func @transform_5(%arg0: i32) -> (i32, i32) {
    %c0_i32 = arith.constant 0 : i32
    %c0_i32_0 = arith.constant 0 : i32
    return %arg0, %c0_i32 : i32, i32
  }
}

</mosaic_0001>

<llo_original>
// kernel: transformer_mlp_forward.1
$region0: #{transformer_mlp_forward.1}
  #allocation0 [shape = 'u32[]', space=smem, size = 0x4, offset = 0x4, fixed_abs, tag = 'smem constant byte address 0x4 - core index']
  #allocation1 [shape = 'u32[144,128]{1,0:T(1,128)}', space=vmem, size = 0x12000, scoped, tag = 'internal scratch']
  %s0 = inlined_call_operand.vmem [shape: f32[8,128], index: 0, kind: input, shape index: {}]
  %s1 = inlined_call_operand.vmem [shape: f32[128,128], index: 1, kind: input, shape index: {}]
  %s2 = inlined_call_operand.vmem [shape: f32[128,128], index: 2, kind: input, shape index: {}]
  %s3 = inlined_call_operand.vmem [shape: f32[128,128], index: 3, kind: input, shape index: {}]
  %s4 = inlined_call_operand.vmem [shape: f32[8,128], index: 4, kind: input, shape index: {}]
  %s5 = inlined_call_operand.vmem [shape: f32[8,128], index: 5, kind: output, shape index: {}]
  %s6 = sld [smem:[#allocation0]]
  $region30: #{transformer_mlp_forward.1} parent=0
    _
  %s8 = ssub.s32 1, %s6
  %s9 = scalar_select 0, %s8, %s6
  // Predicated region
  $region2: #{transformer_mlp_forward.1} parent=0 // pred_check
    _
  $region3: #{transformer_mlp_forward.1} parent=0 // pred_check_branch
    %11 = sbr.rel (0) target = $region5
  $region4: #{transformer_mlp_forward.1} parent=0 // pred_region
    _
  $region5: #{transformer_mlp_forward.1} parent=0 // pred_fallthru
    _
  // Predicated region
  $region6: #{transformer_mlp_forward.1} parent=0 // pred_check
    _
  $region7: #{transformer_mlp_forward.1} parent=0 // pred_check_branch
    %13 = sbr.rel (0) target = $region9
  $region8: #{transformer_mlp_forward.1} parent=0 // pred_region
    _
  $region9: #{transformer_mlp_forward.1} parent=0 // pred_fallthru
    _
  // Predicated region
  $region10: #{transformer_mlp_forward.1} parent=0 // pred_check
    _
  $region11: #{transformer_mlp_forward.1} parent=0 // pred_check_branch
    %15 = sbr.rel (0) target = $region13
  $region12: #{transformer_mlp_forward.1} parent=0 // pred_region
    _
  $region13: #{transformer_mlp_forward.1} parent=0 // pred_fallthru
    _
  // Predicated region
  $region14: #{transformer_mlp_forward.1} parent=0 // pred_check
    _
  $region15: #{transformer_mlp_forward.1} parent=0 // pred_check_branch
    %17 = sbr.rel (0) target = $region17
  $region16: #{transformer_mlp_forward.1} parent=0 // pred_region
    _
  $region17: #{transformer_mlp_forward.1} parent=0 // pred_fallthru
    _
  // Predicated region
  $region18: #{transformer_mlp_forward.1} parent=0 // pred_check
    _
  $region19: #{transformer_mlp_forward.1} parent=0 // pred_check_branch
    %19 = sbr.rel (0) target = $region21
  $region20: #{transformer_mlp_forward.1} parent=0 // pred_region
    _
  $region21: #{transformer_mlp_forward.1} parent=0 // pred_fallthru
    _
  %v20 = vld [vmem:[%s0] sm:$0xff]
  %v21 = vld [vmem:[%s1] sm:$0xff]
  %v22 = vld [vmem:[%s1 + $0x8] sm:$0xff]
  %v23 = vld [vmem:[%s1 + $0x10] sm:$0xff]
  %v24 = vld [vmem:[%s1 + $0x18] sm:$0xff]
  %v25 = vld [vmem:[%s1 + $0x20] sm:$0xff]
  %v26 = vld [vmem:[%s1 + $0x28] sm:$0xff]
  %v27 = vld [vmem:[%s1 + $0x30] sm:$0xff]
  %v28 = vld [vmem:[%s1 + $0x38] sm:$0xff]
  %v29 = vld [vmem:[%s1 + $0x40] sm:$0xff]
  %v30 = vld [vmem:[%s1 + $0x48] sm:$0xff]
  %v31 = vld [vmem:[%s1 + $0x50] sm:$0xff]
  %v32 = vld [vmem:[%s1 + $0x58] sm:$0xff]
  %v33 = vld [vmem:[%s1 + $0x60] sm:$0xff]
  %v34 = vld [vmem:[%s1 + $0x68] sm:$0xff]
  %v35 = vld [vmem:[%s1 + $0x70] sm:$0xff]
  %v36 = vld [vmem:[%s1 + $0x78] sm:$0xff]
  %v37 = vld [vmem:[%s4] sm:$0x1]
  %v38 = vlaneseq
  %v39 = vshrl.u32 %v38, 7
  %v40 = vsub.s32 0, %v39
  %v41 = vrot.slane %v37, %v40
  %42 = vmatprep.subr.mxu0 0.0
  %43 = vmatpush1.msra.mxu0 %v21
  %44 = vmatprep.subr.mxu0 0.0
  %45 = vmatpush1.msra.mxu0 %v22
  %46 = vmatprep.subr.mxu0 0.0
  %47 = vmatpush1.msra.mxu0 %v23
  %48 = vmatprep.subr.mxu0 0.0
  %49 = vmatpush1.msra.mxu0 %v24
  %50 = vmatprep.subr.mxu0 0.0
  %51 = vmatpush1.msra.mxu0 %v25
  %52 = vmatprep.subr.mxu0 0.0
  %53 = vmatpush1.msra.mxu0 %v26
  %54 = vmatprep.subr.mxu0 0.0
  %55 = vmatpush1.msra.mxu0 %v27
  %56 = vmatprep.subr.mxu0 0.0
  %57 = vmatpush1.msra.mxu0 %v28
  %58 = vmatprep.subr.mxu0 0.0
  %59 = vmatpush1.msra.mxu0 %v29
  %60 = vmatprep.subr.mxu0 0.0
  %61 = vmatpush1.msra.mxu0 %v30
  %62 = vmatprep.subr.mxu0 0.0
  %63 = vmatpush1.msra.mxu0 %v31
  %64 = vmatprep.subr.mxu0 0.0
  %65 = vmatpush1.msra.mxu0 %v32
  %66 = vmatprep.subr.mxu0 0.0
  %67 = vmatpush1.msra.mxu0 %v33
  %68 = vmatprep.subr.mxu0 0.0
  %69 = vmatpush1.msra.mxu0 %v34
  %70 = vmatprep.subr.mxu0 0.0
  %71 = vmatpush1.msra.mxu0 %v35
  %72 = vmatprep.subr.mxu0 0.0
  %73 = vmatpush1.msra.mxu0 %v36
  %74 = vmatprep.subr.mxu0 0.0
  %75 = vmatpush1.msra.mxu0 0.0
  %76 = vmatprep.subr.mxu0 0.0
  %77 = vmatpush1.msra.mxu0 0.0
  %78 = vmatprep.subr.mxu0 0.0
  %79 = vmatpush1.msra.mxu0 0.0
  %80 = vmatprep.subr.mxu0 0.0
  %81 = vmatpush1.msra.mxu0 0.0
  %82 = vmatprep.subr.mxu0 0.0
  %83 = vmatpush1.msra.mxu0 0.0
  %84 = vmatprep.subr.mxu0 0.0
  %85 = vmatpush1.msra.mxu0 0.0
  %86 = vmatprep.subr.mxu0 0.0
  %87 = vmatpush1.msra.mxu0 0.0
  %88 = vmatprep.subr.mxu0 0.0
  %89 = vmatpush1.msra.mxu0 0.0
  %90 = vmatprep.subr.mxu0 0.0
  %91 = vmatpush1.msra.mxu0 0.0
  %92 = vmatprep.subr.mxu0 0.0
  %93 = vmatpush1.msra.mxu0 0.0
  %94 = vmatprep.subr.mxu0 0.0
  %95 = vmatpush1.msra.mxu0 0.0
  %96 = vmatprep.subr.mxu0 0.0
  %97 = vmatpush1.msra.mxu0 0.0
  %98 = vmatprep.subr.mxu0 0.0
  %99 = vmatpush1.msra.mxu0 0.0
  %100 = vmatprep.subr.mxu0 0.0
  %101 = vmatpush1.msra.mxu0 0.0
  %102 = vmatprep.subr.mxu0 0.0
  %103 = vmatpush1.msra.mxu0 0.0
  %104 = vmatprep.subr.mxu0 0.0
  %105 = vmatpush1.msra.mxu0 0.0
  %106 = vmatprep.mubr.f32.mxu0 0.0
  %107 = vmatmul.mubr.f32.gmra.mrb[0].mxu0 %v20
  %v108 = vpop.f32.mrb[0].mxu0
  %v109 = vadd.f32 %v41, %v108
  %v110 = vpop.f32.mrb[0].mxu0
  %111 = vdwg.mxu0
  %v112 = vmax.f32 %v109, 0.0
  %v113 = vld [vmem:[%s2] sm:$0xff]
  %v114 = vld [vmem:[%s2 + $0x8] sm:$0xff]
  %v115 = vld [vmem:[%s2 + $0x10] sm:$0xff]
  %v116 = vld [vmem:[%s2 + $0x18] sm:$0xff]
  %v117 = vld [vmem:[%s2 + $0x20] sm:$0xff]
  %v118 = vld [vmem:[%s2 + $0x28] sm:$0xff]
  %v119 = vld [vmem:[%s2 + $0x30] sm:$0xff]
  %v120 = vld [vmem:[%s2 + $0x38] sm:$0xff]
  %v121 = vld [vmem:[%s2 + $0x40] sm:$0xff]
  %v122 = vld [vmem:[%s2 + $0x48] sm:$0xff]
  %v123 = vld [vmem:[%s2 + $0x50] sm:$0xff]
  %v124 = vld [vmem:[%s2 + $0x58] sm:$0xff]
  %v125 = vld [vmem:[%s2 + $0x60] sm:$0xff]
  %v126 = vld [vmem:[%s2 + $0x68] sm:$0xff]
  %v127 = vld [vmem:[%s2 + $0x70] sm:$0xff]
  %v128 = vld [vmem:[%s2 + $0x78] sm:$0xff]
  %v129 = vld [vmem:[%s4 + $0x1] sm:$0x1]
  %v130 = vlaneseq
  %v131 = vshrl.u32 %v130, 7
  %v132 = vsub.s32 0, %v131
  %v133 = vrot.slane %v129, %v132
  %134 = vmatprep.subr.mxu0 0.0
  %135 = vmatpush1.msra.mxu0 %v113
  %136 = vmatprep.subr.mxu0 0.0
  %137 = vmatpush1.msra.mxu0 %v114
  %138 = vmatprep.subr.mxu0 0.0
  %139 = vmatpush1.msra.mxu0 %v115
  %140 = vmatprep.subr.mxu0 0.0
  %141 = vmatpush1.msra.mxu0 %v116
  %142 = vmatprep.subr.mxu0 0.0
  %143 = vmatpush1.msra.mxu0 %v117
  %144 = vmatprep.subr.mxu0 0.0
  %145 = vmatpush1.msra.mxu0 %v118
  %146 = vmatprep.subr.mxu0 0.0
  %147 = vmatpush1.msra.mxu0 %v119
  %148 = vmatprep.subr.mxu0 0.0
  %149 = vmatpush1.msra.mxu0 %v120
  %150 = vmatprep.subr.mxu0 0.0
  %151 = vmatpush1.msra.mxu0 %v121
  %152 = vmatprep.subr.mxu0 0.0
  %153 = vmatpush1.msra.mxu0 %v122
  %154 = vmatprep.subr.mxu0 0.0
  %155 = vmatpush1.msra.mxu0 %v123
  %156 = vmatprep.subr.mxu0 0.0
  %157 = vmatpush1.msra.mxu0 %v124
  %158 = vmatprep.subr.mxu0 0.0
  %159 = vmatpush1.msra.mxu0 %v125
  %160 = vmatprep.subr.mxu0 0.0
  %161 = vmatpush1.msra.mxu0 %v126
  %162 = vmatprep.subr.mxu0 0.0
  %163 = vmatpush1.msra.mxu0 %v127
  %164 = vmatprep.subr.mxu0 0.0
  %165 = vmatpush1.msra.mxu0 %v128
  %166 = vmatprep.subr.mxu0 0.0
  %167 = vmatpush1.msra.mxu0 0.0
  %168 = vmatprep.subr.mxu0 0.0
  %169 = vmatpush1.msra.mxu0 0.0
  %170 = vmatprep.subr.mxu0 0.0
  %171 = vmatpush1.msra.mxu0 0.0
  %172 = vmatprep.subr.mxu0 0.0
  %173 = vmatpush1.msra.mxu0 0.0
  %174 = vmatprep.subr.mxu0 0.0
  %175 = vmatpush1.msra.mxu0 0.0
  %176 = vmatprep.subr.mxu0 0.0
  %177 = vmatpush1.msra.mxu0 0.0
  %178 = vmatprep.subr.mxu0 0.0
  %179 = vmatpush1.msra.mxu0 0.0
  %180 = vmatprep.subr.mxu0 0.0
  %181 = vmatpush1.msra.mxu0 0.0
  %182 = vmatprep.subr.mxu0 0.0
  %183 = vmatpush1.msra.mxu0 0.0
  %184 = vmatprep.subr.mxu0 0.0
  %185 = vmatpush1.msra.mxu0 0.0
  %186 = vmatprep.subr.mxu0 0.0
  %187 = vmatpush1.msra.mxu0 0.0
  %188 = vmatprep.subr.mxu0 0.0
  %189 = vmatpush1.msra.mxu0 0.0
  %190 = vmatprep.subr.mxu0 0.0
  %191 = vmatpush1.msra.mxu0 0.0
  %192 = vmatprep.subr.mxu0 0.0
  %193 = vmatpush1.msra.mxu0 0.0
  %194 = vmatprep.subr.mxu0 0.0
  %195 = vmatpush1.msra.mxu0 0.0
  %196 = vmatprep.subr.mxu0 0.0
  %197 = vmatpush1.msra.mxu0 0.0
  %198 = vmatprep.mubr.f32.mxu0 0.0
  %199 = vmatmul.mubr.f32.gmra.mrb[0].mxu0 %v112
  %v200 = vpop.f32.mrb[0].mxu0
  %v201 = vadd.f32 %v133, %v200
  %v202 = vpop.f32.mrb[0].mxu0
  %203 = vdwg.mxu0
  %v204 = vmax.f32 %v201, 0.0
  %v205 = vld [vmem:[%s3] sm:$0xff]
  %v206 = vld [vmem:[%s3 + $0x8] sm:$0xff]
  %v207 = vld [vmem:[%s3 + $0x10] sm:$0xff]
  %v208 = vld [vmem:[%s3 + $0x18] sm:$0xff]
  %v209 = vld [vmem:[%s3 + $0x20] sm:$0xff]
  %v210 = vld [vmem:[%s3 + $0x28] sm:$0xff]
  %v211 = vld [vmem:[%s3 + $0x30] sm:$0xff]
  %v212 = vld [vmem:[%s3 + $0x38] sm:$0xff]
  %v213 = vld [vmem:[%s3 + $0x40] sm:$0xff]
  %v214 = vld [vmem:[%s3 + $0x48] sm:$0xff]
  %v215 = vld [vmem:[%s3 + $0x50] sm:$0xff]
  %v216 = vld [vmem:[%s3 + $0x58] sm:$0xff]
  %v217 = vld [vmem:[%s3 + $0x60] sm:$0xff]
  %v218 = vld [vmem:[%s3 + $0x68] sm:$0xff]
  %v219 = vld [vmem:[%s3 + $0x70] sm:$0xff]
  %v220 = vld [vmem:[%s3 + $0x78] sm:$0xff]
  %v221 = vld [vmem:[%s4 + $0x2] sm:$0x1]
  %v222 = vlaneseq
  %v223 = vshrl.u32 %v222, 7
  %v224 = vsub.s32 0, %v223
  %v225 = vrot.slane %v221, %v224
  %226 = vmatprep.subr.mxu0 0.0
  %227 = vmatpush1.msra.mxu0 %v205
  %228 = vmatprep.subr.mxu0 0.0
  %229 = vmatpush1.msra.mxu0 %v206
  %230 = vmatprep.subr.mxu0 0.0
  %231 = vmatpush1.msra.mxu0 %v207
  %232 = vmatprep.subr.mxu0 0.0
  %233 = vmatpush1.msra.mxu0 %v208
  %234 = vmatprep.subr.mxu0 0.0
  %235 = vmatpush1.msra.mxu0 %v209
  %236 = vmatprep.subr.mxu0 0.0
  %237 = vmatpush1.msra.mxu0 %v210
  %238 = vmatprep.subr.mxu0 0.0
  %239 = vmatpush1.msra.mxu0 %v211
  %240 = vmatprep.subr.mxu0 0.0
  %241 = vmatpush1.msra.mxu0 %v212
  %242 = vmatprep.subr.mxu0 0.0
  %243 = vmatpush1.msra.mxu0 %v213
  %244 = vmatprep.subr.mxu0 0.0
  %245 = vmatpush1.msra.mxu0 %v214
  %246 = vmatprep.subr.mxu0 0.0
  %247 = vmatpush1.msra.mxu0 %v215
  %248 = vmatprep.subr.mxu0 0.0
  %249 = vmatpush1.msra.mxu0 %v216
  %250 = vmatprep.subr.mxu0 0.0
  %251 = vmatpush1.msra.mxu0 %v217
  %252 = vmatprep.subr.mxu0 0.0
  %253 = vmatpush1.msra.mxu0 %v218
  %254 = vmatprep.subr.mxu0 0.0
  %255 = vmatpush1.msra.mxu0 %v219
  %256 = vmatprep.subr.mxu0 0.0
  %257 = vmatpush1.msra.mxu0 %v220
  %258 = vmatprep.subr.mxu0 0.0
  %259 = vmatpush1.msra.mxu0 0.0
  %260 = vmatprep.subr.mxu0 0.0
  %261 = vmatpush1.msra.mxu0 0.0
  %262 = vmatprep.subr.mxu0 0.0
  %263 = vmatpush1.msra.mxu0 0.0
  %264 = vmatprep.subr.mxu0 0.0
  %265 = vmatpush1.msra.mxu0 0.0
  %266 = vmatprep.subr.mxu0 0.0
  %267 = vmatpush1.msra.mxu0 0.0
  %268 = vmatprep.subr.mxu0 0.0
  %269 = vmatpush1.msra.mxu0 0.0
  %270 = vmatprep.subr.mxu0 0.0
  %271 = vmatpush1.msra.mxu0 0.0
  %272 = vmatprep.subr.mxu0 0.0
  %273 = vmatpush1.msra.mxu0 0.0
  %274 = vmatprep.subr.mxu0 0.0
  %275 = vmatpush1.msra.mxu0 0.0
  %276 = vmatprep.subr.mxu0 0.0
  %277 = vmatpush1.msra.mxu0 0.0
  %278 = vmatprep.subr.mxu0 0.0
  %279 = vmatpush1.msra.mxu0 0.0
  %280 = vmatprep.subr.mxu0 0.0
  %281 = vmatpush1.msra.mxu0 0.0
  %282 = vmatprep.subr.mxu0 0.0
  %283 = vmatpush1.msra.mxu0 0.0
  %284 = vmatprep.subr.mxu0 0.0
  %285 = vmatpush1.msra.mxu0 0.0
  %286 = vmatprep.subr.mxu0 0.0
  %287 = vmatpush1.msra.mxu0 0.0
  %288 = vmatprep.subr.mxu0 0.0
  %289 = vmatpush1.msra.mxu0 0.0
  %290 = vmatprep.mubr.f32.mxu0 0.0
  %291 = vmatmul.mubr.f32.gmra.mrb[0].mxu0 %v204
  %v292 = vpop.f32.mrb[0].mxu0
  %v293 = vadd.f32 %v225, %v292
  %v294 = vpop.f32.mrb[0].mxu0
  %295 = vdwg.mxu0
  %296 = vst [vmem:[%s5] sm:$0xff] %v293
  // Predicated region
  $region22: #{transformer_mlp_forward.1} parent=0 // pred_check
    _
  $region23: #{transformer_mlp_forward.1} parent=0 // pred_check_branch
    %298 = sbr.rel (0) target = $region25
  $region24: #{transformer_mlp_forward.1} parent=0 // pred_region
    _
  $region25: #{transformer_mlp_forward.1} parent=0 // pred_fallthru
    _
  // Predicated region
  $region26: #{transformer_mlp_forward.1} parent=0 // pred_check
    _
  $region27: #{transformer_mlp_forward.1} parent=0 // pred_check_branch
    %300 = sbr.rel (0) target = $region29
  $region28: #{transformer_mlp_forward.1} parent=0 // pred_region
    _
  $region29: #{transformer_mlp_forward.1} parent=0 // pred_fallthru
    _

</llo_original>
